<compile_context>
chip_gen: v6e
topology: v6e:2x2x1
jax: 0.10.0
libtpu: 0.0.40
codegen_flags: <defaults>
</compile_context>

<pallas_src>
import functools
import math

import jax
import jax.numpy as jnp
from jax import lax
from jax.experimental import pallas as pl
from jax.experimental.pallas import tpu as pltpu


# ---------------------------------------------------------------------------
# Pallas kernels (elementwise, lane-dense tiles over a folded (rows, T) view)
# ---------------------------------------------------------------------------

def _snake_kernel(x_ref, a2_ref, hia_ref, o_ref):
    # x_ref: (r_tile, t_tile) tile of the folded (rows, length) activation.
    # a2_ref / hia_ref: (r_tile, 1) per-row constants
    #   a2  = 2 * alpha[c],  hia = 0.5 / (alpha[c] + 1e-9)
    x = x_ref[...].astype(jnp.float32)
    y = x + (1.0 - jnp.cos(a2_ref[...] * x)) * hia_ref[...]
    o_ref[...] = y.astype(o_ref.dtype)


def _tanh_kernel(x_ref, o_ref):
    o_ref[...] = jnp.tanh(x_ref[...].astype(jnp.float32)).astype(o_ref.dtype)


# ---------------------------------------------------------------------------
# Tiling helpers
# ---------------------------------------------------------------------------

def _sublane(dtype):
    # Native sublane multiple for the dtype: 8 (32-bit), 16 (bf16), 32 (int8/fp8).
    return {4: 8, 2: 16, 1: 32}.get(jnp.dtype(dtype).itemsize, 8)


@functools.lru_cache(maxsize=None)
def _vmem_capacity_bytes():
    try:
        return int(pltpu.get_tpu_info().vmem_capacity_bytes)
    except Exception:
        return 64 * 1024 * 1024  # v7x per-TC VMEM (the smallest) -> safe fallback


def _tile_plan(R, T, itemsize, sub):
    """Pick (r_tile, t_tile, vmem_limit) for a (R, T) elementwise kernel."""
    vmem = _vmem_capacity_bytes()
    # 2 in-buffers + 2 out-buffers (double buffering) of one block must fit with
    # ample headroom: block <= VMEM/16, capped at 8 MiB (v6e/v5e) / 4 MiB (v7x).
    block_cap = max(64 * 1024, min(vmem // 16, 8 * 1024 * 1024))
    vmem_limit = int(min((vmem * 3) // 4, 8 * block_cap))

    # Rows first: sublane-full, but reserve at least 512 lanes of budget.
    if R <= sub:
        r_tile = R                                    # equal-to-full-dim block
    else:
        rows_cap = max(sub, (block_cap // (512 * itemsize)) // sub * sub)
        r_tile = max(sub, min((R // sub) * sub, rows_cap))

    # Lane axis soaks up the remaining byte budget (multiples of 128).
    if T <= 128:
        t_tile = T                                    # equal-to-full-dim block
    else:
        t_budget = max(128, (block_cap // (r_tile * itemsize)) // 128 * 128)
        t_tile = max(128, min((T // 128) * 128, t_budget))

    # v7x megacore: expose >= 2 blocks along a "parallel" axis when possible
    # without shrinking below one native (sub, 128) tile.
    if pl.cdiv(R, r_tile) * pl.cdiv(T, t_tile) < 2:
        if t_tile >= 256:
            t_tile = max(128, (t_tile // 2) // 128 * 128)
        elif r_tile >= 2 * sub:
            r_tile = max(sub, (r_tile // 2) // sub * sub)

    return r_tile, t_tile, vmem_limit


def _fold_factor(rows, length, sub):
    """Split the length axis into `s` contiguous pieces per row so the folded
    row count reaches a full sublane group (e.g. the final C=1 Tanh has only
    B rows).  `s` must divide `length`; prefer keeping >=128 lanes per row."""
    if rows >= sub or length <= 1:
        return 1
    want = -(-sub // rows)  # ceil(sub / rows)
    fallback = 1
    for s in range(want, min(length, 64 * want) + 1):
        if length % s == 0:
            if (length // s) >= 128:
                return s
            if fallback == 1:
                fallback = s
    return fallback


def _pallas_rows_by_lanes(kernel, x2, per_row=(), *, donate=False,
                          flops_per_elem=4, transcendentals_per_elem=1):
    """Run an elementwise kernel over a 2-D (rows, length) array.

    No padding / slicing: the grid is cdiv-sized and Pallas masks the ragged
    edge blocks (elementwise kernels tolerate garbage reads in the overhang).
    """
    R, T = x2.shape
    itemsize = x2.dtype.itemsize
    sub = _sublane(x2.dtype)
    r_tile, t_tile, vmem_limit = _tile_plan(R, T, itemsize, sub)
    grid = (pl.cdiv(R, r_tile), pl.cdiv(T, t_tile))  # lane axis innermost

    data_spec = pl.BlockSpec((r_tile, t_tile), lambda r, t: (r, t))
    row_spec = pl.BlockSpec((r_tile, 1), lambda r, t: (r, 0))

    extra = {}
    if donate:
        # Only safe/profitable when the input value is dead after this call
        # (call sites under jit); saves the output HBM allocation.
        extra["input_output_aliases"] = {0: 0}

    per_row_bytes = sum(int(p.size) * p.dtype.itemsize for p in per_row)
    return pl.pallas_call(
        kernel,
        out_shape=jax.ShapeDtypeStruct((R, T), x2.dtype),
        grid_spec=pltpu.PrefetchScalarGridSpec(
            num_scalar_prefetch=0,
            grid=grid,
            in_specs=[data_spec] + [row_spec] * len(per_row),
            out_specs=data_spec,
        ),
        compiler_params=pltpu.CompilerParams(
            dimension_semantics=("parallel", "parallel"),
            vmem_limit_bytes=vmem_limit,
            # Let XLA fuse the producing bias-add / elementwise epilogue into
            # this kernel's input read (data input only).
            allow_input_fusion=[True] + [False] * len(per_row),
        ),
        cost_estimate=pl.CostEstimate(
            flops=flops_per_elem * R * T,
            transcendentals=transcendentals_per_elem * R * T,
            bytes_accessed=2 * R * T * itemsize + per_row_bytes,
        ),
        **extra,
    )(x2, *per_row)


# ---------------------------------------------------------------------------
# Public activation wrappers
# ---------------------------------------------------------------------------

def snake1d(x, alpha, *, donate=False):
    """Snake activation.  x: (B, C, T), alpha: (1, C, 1) (any shape w/ C elems)."""
    B, C, T = x.shape
    R = B * C
    a = jnp.reshape(alpha, (-1,)).astype(jnp.float32)
    assert a.shape[0] == C
    s = _fold_factor(R, T, _sublane(x.dtype))
    Rf, Tf = R * s, T // s
    a_row = jnp.tile(a, B)                 # row = b*C + c  ->  alpha[c]
    if s > 1:
        a_row = jnp.repeat(a_row, s)       # each original row split into s rows
    a2 = (2.0 * a_row).reshape(Rf, 1)
    hia = (0.5 / (a_row + 1e-9)).reshape(Rf, 1)
    out = _pallas_rows_by_lanes(_snake_kernel, x.reshape(Rf, Tf), (a2, hia),
                                donate=donate, flops_per_elem=4,
                                transcendentals_per_elem=1)
    return out.reshape(B, C, T)


def tanh1d(x, *, donate=False):
    B, C, T = x.shape
    R = B * C
    s = _fold_factor(R, T, _sublane(x.dtype))
    out = _pallas_rows_by_lanes(_tanh_kernel, x.reshape(R * s, T // s), (),
                                donate=donate, flops_per_elem=1,
                                transcendentals_per_elem=1)
    return out.reshape(B, C, T)


# ---------------------------------------------------------------------------
# LAC decoder forward (convs as XLA ops, activations as Pallas kernels)
# ---------------------------------------------------------------------------

def _conv1d(x, w, b, *, padding=0, dilation=1):
    # x: (B, Cin, L), w: (Cout, Cin, K), b: (Cout,)
    y = lax.conv_general_dilated(
        x, w, window_strides=(1,), padding=[(padding, padding)],
        rhs_dilation=(dilation,), dimension_numbers=("NCH", "OIH", "NCH"))
    return y + b[None, :, None]


def _conv_transpose1d(x, w, b, *, stride, padding):
    # PyTorch ConvTranspose1d weight layout: (Cin, Cout, K).
    k = w.shape[-1]
    w_flip = jnp.flip(jnp.transpose(w, (1, 0, 2)), axis=-1)  # (Cout, Cin, K)
    edge = k - 1 - padding
    y = lax.conv_general_dilated(
        x, w_flip, window_strides=(1,), padding=[(edge, edge)],
        lhs_dilation=(stride,), dimension_numbers=("NCH", "OIH", "NCH"))
    return y + b[None, :, None]


def _init_decoder_params(key, d_in, channels, rates, d_out=1):
    keys = iter(jax.random.split(key, 256))

    def conv_p(cin, cout, k):
        return {"w": 0.05 * jax.random.normal(next(keys), (cout, cin, k), jnp.float32),
                "b": 0.01 * jax.random.normal(next(keys), (cout,), jnp.float32)}

    def convT_p(cin, cout, k):
        return {"w": 0.05 * jax.random.normal(next(keys), (cin, cout, k), jnp.float32),
                "b": 0.01 * jax.random.normal(next(keys), (cout,), jnp.float32)}

    def alpha_p(c):
        return 0.5 + jax.random.uniform(next(keys), (1, c, 1), dtype=jnp.float32)

    params = {"conv_in": conv_p(d_in, channels, 7), "blocks": []}
    dim = channels
    for stride in rates:
        out_dim = dim // 2
        blk = {"alpha": alpha_p(dim), "convT": convT_p(dim, out_dim, 2 * stride),
               "stride": stride, "res": []}
        for dil in (1, 3, 9):
            blk["res"].append({"alpha1": alpha_p(out_dim),
                               "conv1": conv_p(out_dim, out_dim, 7),
                               "alpha2": alpha_p(out_dim),
                               "conv2": conv_p(out_dim, out_dim, 1),
                               "dilation": dil})
        params["blocks"].append(blk)
        dim = out_dim
    params["alpha_out"] = alpha_p(dim)
    params["conv_out"] = conv_p(dim, d_out, 7)
    return params


def lac_decoder_forward(x, params, *, snake_fn, tanh_fn):
    y = _conv1d(x, params["conv_in"]["w"], params["conv_in"]["b"], padding=3)
    for blk in params["blocks"]:
        y = snake_fn(y, blk["alpha"], donate=True)           # y dead afterwards
        s = blk["stride"]
        y = _conv_transpose1d(y, blk["convT"]["w"], blk["convT"]["b"],
                              stride=s, padding=math.ceil(s / 2))
        for ru in blk["res"]:
            d = ru["dilation"]
            r = snake_fn(y, ru["alpha1"], donate=False)       # y kept for skip
            r = _conv1d(r, ru["conv1"]["w"], ru["conv1"]["b"],
                        padding=((7 - 1) * d) // 2, dilation=d)
            r = snake_fn(r, ru["alpha2"], donate=True)
            r = _conv1d(r, ru["conv2"]["w"], ru["conv2"]["b"], padding=0)
            pad = (y.shape[-1] - r.shape[-1]) // 2
            if pad > 0:
                y = y[..., pad:-pad]
            y = y + r
    y = snake_fn(y, params["alpha_out"], donate=True)
    y = _conv1d(y, params["conv_out"]["w"], params["conv_out"]["b"], padding=3)
    return tanh_fn(y, donate=True)


# Pure-JAX references (accept/ignore the `donate` kwarg).
def _snake_ref(x, alpha, donate=False):
    del donate
    return x + (1.0 / (alpha + 1e-9)) * jnp.sin(alpha * x) ** 2


def _tanh_ref(x, donate=False):
    del donate
    return jnp.tanh(x)


if __name__ == "__main__":
    key = jax.random.PRNGKey(0)
    k_params, k_x, k_a = jax.random.split(key, 3)

    # Small LAC-decoder-shaped config: latent (B, C_in, T) -> audio (B, 1, T*prod(rates)).
    B, C_in, T = 2, 8, 16
    channels, rates = 32, (2, 2)

    x = jax.random.normal(k_x, (B, C_in, T), dtype=jnp.float32)
    params = _init_decoder_params(k_params, C_in, channels, rates)

    # 1) Standalone Pallas Snake1d kernel (f32) vs the DAC formula.
    alpha = 0.5 + jax.random.uniform(k_a, (1, channels, 1), dtype=jnp.float32)
    xs = jax.random.normal(k_x, (B, channels, 4 * T), dtype=jnp.float32)
    ys = jax.block_until_ready(snake1d(xs, alpha))
    assert jnp.allclose(ys, _snake_ref(xs, alpha), atol=1e-5, rtol=1e-5)

    # 2) bf16-I/O Snake1d (halves HBM traffic of the memory-bound kernel; f32 math inside).
    xs_bf = jax.random.normal(k_x, (B, channels, 16 * T), jnp.float32).astype(jnp.bfloat16)
    ys_bf = jax.block_until_ready(snake1d(xs_bf, alpha))
    ref_bf = _snake_ref(xs_bf.astype(jnp.float32), alpha)
    assert jnp.allclose(ys_bf.astype(jnp.float32), ref_bf, atol=2e-2, rtol=2e-2)

    # 3) Full decoder forward (jitted so donated activations alias in place):
    #    Pallas activations vs pure-JAX reference.
    fwd = jax.jit(lambda v: lac_decoder_forward(v, params, snake_fn=snake1d, tanh_fn=tanh1d))
    fwd_ref = jax.jit(lambda v: lac_decoder_forward(v, params, snake_fn=_snake_ref,
                                                    tanh_fn=_tanh_ref))
    y = jax.block_until_ready(fwd(x))
    y_ref = jax.block_until_ready(fwd_ref(x))
    assert y.shape == (B, 1, T * rates[0] * rates[1])
    assert jnp.allclose(y, y_ref, atol=1e-4, rtol=1e-4)

    print("KERNEL_OK")
</pallas_src>

<mosaic_0001>
module attributes {stable_mosaic.version = 11 : i64} {
  func.func @_snake_kernel(%arg0: i32, %arg1: i32, %arg2: memref<32x64xf32, #tpu.memory_space<vmem>>, %arg3: memref<32x1xf32, #tpu.memory_space<vmem>>, %arg4: memref<32x1xf32, #tpu.memory_space<vmem>>, %arg5: memref<32x64xf32, #tpu.memory_space<vmem>>) attributes {dimension_semantics = [#tpu.dimension_semantics<parallel>, #tpu.dimension_semantics<parallel>], iteration_bounds = array<i64: 2, 1>, scalar_prefetch = 0 : i64, scratch_operands = 0 : i64, tpu.core_type = #tpu.core_type<tc>, window_params = [{transform_indices = @transform_0, window_bounds = array<i64: 32, 64>}, {transform_indices = @transform_1, window_bounds = array<i64: 32, 1>}, {transform_indices = @transform_2, window_bounds = array<i64: 32, 1>}, {transform_indices = @transform_3, window_bounds = array<i64: 32, 64>}]} {
    %c0 = arith.constant 0 : index
    %c0_0 = arith.constant 0 : index
    %0 = vector.load %arg2[%c0, %c0_0] : memref<32x64xf32, #tpu.memory_space<vmem>>, vector<32x64xf32>
    %c0_1 = arith.constant 0 : index
    %c0_2 = arith.constant 0 : index
    %1 = vector.load %arg3[%c0_1, %c0_2] : memref<32x1xf32, #tpu.memory_space<vmem>>, vector<32x1xf32>
    %2 = vector.broadcast %1 : vector<32x1xf32> to vector<32x64xf32>
    %3 = arith.mulf %2, %0 : vector<32x64xf32>
    %4 = math.cos %3 : vector<32x64xf32>
    %cst = arith.constant 1.000000e+00 : f32
    %5 = vector.broadcast %cst : f32 to vector<32x64xf32>
    %6 = arith.subf %5, %4 : vector<32x64xf32>
    %c0_3 = arith.constant 0 : index
    %c0_4 = arith.constant 0 : index
    %7 = vector.load %arg4[%c0_3, %c0_4] : memref<32x1xf32, #tpu.memory_space<vmem>>, vector<32x1xf32>
    %8 = vector.broadcast %7 : vector<32x1xf32> to vector<32x64xf32>
    %9 = arith.mulf %6, %8 : vector<32x64xf32>
    %10 = arith.addf %0, %9 : vector<32x64xf32>
    %c0_5 = arith.constant 0 : index
    %c0_6 = arith.constant 0 : index
    %11 = vector.load %arg5[%c0_5, %c0_6] : memref<32x64xf32, #tpu.memory_space<vmem>>, vector<32x64xf32>
    tpu.vector_store %arg5[%c0_5, %c0_6], %10 {strides = array<i32>} : memref<32x64xf32, #tpu.memory_space<vmem>>, vector<32x64xf32>,
    return
  }
  func.func @transform_0(%arg0: i32, %arg1: i32) -> (i32, i32) {
    %c0_i32 = arith.constant 0 : i32
    return %arg0, %arg1 : i32, i32
  }
  func.func @transform_1(%arg0: i32, %arg1: i32) -> (i32, i32) {
    %c0_i32 = arith.constant 0 : i32
    %c0_i32_0 = arith.constant 0 : i32
    return %arg0, %c0_i32 : i32, i32
  }
  func.func @transform_2(%arg0: i32, %arg1: i32) -> (i32, i32) {
    %c0_i32 = arith.constant 0 : i32
    %c0_i32_0 = arith.constant 0 : i32
    return %arg0, %c0_i32 : i32, i32
  }
  func.func @transform_3(%arg0: i32, %arg1: i32) -> (i32, i32) {
    %c0_i32 = arith.constant 0 : i32
    return %arg0, %arg1 : i32, i32
  }
}

</mosaic_0001>

<llo_original>
// kernel: tpu_custom_call.1
$region0: #{tpu_custom_call.1}
  #allocation0 [shape = 'u32[]', space=smem, size = 0x4, offset = 0x4, fixed_abs, tag = 'smem constant byte address 0x4 - core index']
  #allocation1 [shape = 'u32[144,128]{1,0:T(1,128)}', space=vmem, size = 0x12000, scoped, tag = 'internal scratch']
  %s0 = inlined_call_operand.vmem [shape: f32[64,64], index: 0, kind: input, shape index: {}]
  %s1 = inlined_call_operand.vmem [shape: f32[64,1], index: 1, kind: input, shape index: {}]
  %s2 = inlined_call_operand.vmem [shape: f32[64,1], index: 2, kind: input, shape index: {}]
  %s3 = inlined_call_operand.hbm [shape: f32[64,64], index: 3, kind: output, shape index: {}]
  %s4 = sld [smem:[#allocation0]]
  $region45: #{tpu_custom_call.1} parent=0
    _
  %s6 = ssub.s32 1, %s4
  %s7 = scalar_select 0, %s6, %s4
  $region1: #{tpu_custom_call.1} parent=0
    #allocation2 [shape = 'u8[32768]{0}', space=vmem, size = 0x8000, scoped, tag = 'output window, operand 0']
    #allocation3 [shape = 's32[2]{0}', space=sflag, size = 0x8, scoped, tag = 'scoped memory for tpu_custom_call.1']
    %8 = vsyncpa [#allocation3], 0
    %s9 = scalar_lea.sflag [#allocation3], 1
    %10 = vsyncpa %s9, 0
    loop: start=0, step=1, limit=4
    $region2: #{tpu_custom_call.1} parent=1 // loop_pre_header
      _
    $region3: #{tpu_custom_call.1} parent=1 // loop_header
      %s12 = sphi 0, %s16
      %p13 = scmp.ge.s32.totalorder %s12, 4
      %s19 = sphi 0, %s31
      %s20 = sphi 0, %s27
      %s21 = sphi 0, %s19
      %s22 = sphi 0, %s20
      %s23 = sphi 0, %s21
      %s24 = sphi 0, %s22
      %s36 = sphi 0, %s38
      %s39 = sphi 0, %s36
      %s40 = sphi 0, %s39
      %s56 = sphi 0, %s40
      %s62 = sphi 0, %s64
      %s65 = sphi 0, %s62
      %s66 = sphi 0, %s65
      %s82 = sphi 0, %s66
      %s88 = sphi 0, %s90
      %s91 = sphi 0, %s88
      %s92 = sphi 0, %s91
      %s108 = sphi 0, %s92
      %s116 = sphi 0, %s118
      %s119 = sphi 0, %s116
      %s120 = sphi 0, %s119
      %s136 = sphi 0, %s120
    $region4: #{tpu_custom_call.1} parent=1 // loop_header_branch
      %15 = sbr.rel (%p13) target = $region8
    $region5: #{tpu_custom_call.1} parent=1 // loop_body
      %s17 = ssub.s32 %s12, 1
      %s18 = ssub.s32 %s12, 2
      %s25 = sadd.s32 1, %s20
      %p26 = scmp.ge.s32.totalorder %s25, 1
      %s27 = scalar_select %p26, 0, %s25
      %s28 = sadd.s32 1, %s19
      %s29 = scalar_select %p26, %s28, %s19
      %p30 = scmp.ge.s32.totalorder %s29, 2
      %s31 = scalar_select %p30, 0, %s29
      %s32 = ssub.s32 %s19, %s31
      %s33 = ssub.s32 %s20, %s27
      %s34 = sor.u32 %s32, %s33
      %p35 = scmp.eq.s32.totalorder %s34, 0
      %s37 = sadd.s32 %s36, 1
      %s38 = scalar_select %p35, %s36, %s37
      %p41 = pneg %p35
      %p42 = scmp.eq.s32.totalorder %s12, 1
      %p43 = por %p41, %p42
      %p44 = scmp.ne.s32.totalorder %s36, %s39
      %p45 = scmp.eq.s32.totalorder %s12, 0
      %p46 = por %p44, %p45
      %p47 = scmp.ne.s32.totalorder %s36, %s39
      %p48 = scmp.eq.s32.totalorder %s17, 1
      %p49 = por %p47, %p48
      %p50 = scmp.ne.s32.totalorder %s39, %s40
      %p51 = scmp.eq.s32.totalorder %s17, 0
      %p52 = por %p50, %p51
      %p53 = scmp.ne.s32.totalorder %s39, %s40
      %p54 = scmp.eq.s32.totalorder %s18, 1
      %p55 = por %p53, %p54
      %p57 = scmp.ne.s32.totalorder %s40, %s56
      %p58 = scmp.eq.s32.totalorder %s18, 0
      %p59 = por %p57, %p58
      %s60 = ssub.s32 %s19, %s31
      %p61 = scmp.eq.s32.totalorder %s60, 0
      %s63 = sadd.s32 %s62, 1
      %s64 = scalar_select %p61, %s62, %s63
      %p67 = pneg %p61
      %p68 = scmp.eq.s32.totalorder %s12, 1
      %p69 = por %p67, %p68
      %p70 = scmp.ne.s32.totalorder %s62, %s65
      %p71 = scmp.eq.s32.totalorder %s12, 0
      %p72 = por %p70, %p71
      %p73 = scmp.ne.s32.totalorder %s62, %s65
      %p74 = scmp.eq.s32.totalorder %s17, 1
      %p75 = por %p73, %p74
      %p76 = scmp.ne.s32.totalorder %s65, %s66
      %p77 = scmp.eq.s32.totalorder %s17, 0
      %p78 = por %p76, %p77
      %p79 = scmp.ne.s32.totalorder %s65, %s66
      %p80 = scmp.eq.s32.totalorder %s18, 1
      %p81 = por %p79, %p80
      %p83 = scmp.ne.s32.totalorder %s66, %s82
      %p84 = scmp.eq.s32.totalorder %s18, 0
      %p85 = por %p83, %p84
      %s86 = ssub.s32 %s19, %s31
      %p87 = scmp.eq.s32.totalorder %s86, 0
      %s89 = sadd.s32 %s88, 1
      %s90 = scalar_select %p87, %s88, %s89
      %p93 = pneg %p87
      %p94 = scmp.eq.s32.totalorder %s12, 1
      %p95 = por %p93, %p94
      %p96 = scmp.ne.s32.totalorder %s88, %s91
      %p97 = scmp.eq.s32.totalorder %s12, 0
      %p98 = por %p96, %p97
      %p99 = scmp.ne.s32.totalorder %s88, %s91
      %p100 = scmp.eq.s32.totalorder %s17, 1
      %p101 = por %p99, %p100
      %p102 = scmp.ne.s32.totalorder %s91, %s92
      %p103 = scmp.eq.s32.totalorder %s17, 0
      %p104 = por %p102, %p103
      %p105 = scmp.ne.s32.totalorder %s91, %s92
      %p106 = scmp.eq.s32.totalorder %s18, 1
      %p107 = por %p105, %p106
      %p109 = scmp.ne.s32.totalorder %s92, %s108
      %p110 = scmp.eq.s32.totalorder %s18, 0
      %p111 = por %p109, %p110
      %s112 = ssub.s32 %s19, %s31
      %s113 = ssub.s32 %s20, %s27
      %s114 = sor.u32 %s112, %s113
      %p115 = scmp.eq.s32.totalorder %s114, 0
      %s117 = sadd.s32 %s116, 1
      %s118 = scalar_select %p115, %s116, %s117
      %p121 = pneg %p115
      %p122 = scmp.eq.s32.totalorder %s12, 1
      %p123 = por %p121, %p122
      %p124 = scmp.ne.s32.totalorder %s116, %s119
      %p125 = scmp.eq.s32.totalorder %s12, 0
      %p126 = por %p124, %p125
      %p127 = scmp.ne.s32.totalorder %s116, %s119
      %p128 = scmp.eq.s32.totalorder %s17, 1
      %p129 = por %p127, %p128
      %p130 = scmp.ne.s32.totalorder %s119, %s120
      %p131 = scmp.eq.s32.totalorder %s17, 0
      %p132 = por %p130, %p131
      %p133 = scmp.ne.s32.totalorder %s119, %s120
      %p134 = scmp.eq.s32.totalorder %s18, 1
      %p135 = por %p133, %p134
      %p137 = scmp.ne.s32.totalorder %s120, %s136
      %p138 = scmp.eq.s32.totalorder %s18, 0
      %p139 = por %p137, %p138
      %p140 = scmp.le.s32.totalorder 1, %s12
      %p141 = scmp.lt.s32.totalorder %s12, 3
      %p142 = pnand %p140, %p141
      %p143 = pneg %p142
      // Predicated region
      $region9: #{tpu_custom_call.1} parent=5 // pred_check
        _
      $region10: #{tpu_custom_call.1} parent=5 // pred_check_branch
        %145 = sbr.rel (%p142) target = $region12
      $region11: #{tpu_custom_call.1} parent=5 // pred_region
        %s146 = ssub.s32 %s12, 1
      $region12: #{tpu_custom_call.1} parent=5 // pred_fallthru
        _
      %p147 = scmp.lt.s32.totalorder %s12, 2
      // Predicated region
      $region13: #{tpu_custom_call.1} parent=5 // pred_check
        %p148 = pneg %p147
      $region14: #{tpu_custom_call.1} parent=5 // pred_check_branch
        %150 = sbr.rel (%p148) target = $region16
      $region15: #{tpu_custom_call.1} parent=5 // pred_region
        // Predicated region
        $region17: #{tpu_custom_call.1} parent=15 // pred_check
          %p151 = pneg %p46
        $region18: #{tpu_custom_call.1} parent=15 // pred_check_branch
          %153 = sbr.rel (%p151) target = $region20
        $region19: #{tpu_custom_call.1} parent=15 // pred_region
          %s154 = smul.u32 4, %s19
          %p155 = scmp.lt.s32.totalorder %s154, 7
          %s156 = scalar_select %p155, %s154, 7
          %p157 = scmp.lt.s32.totalorder %s20, 0
          %s158 = scalar_select %p157, %s20, 0
          %s159 = sadd.s32 %s158, %s156
          %s160 = smul.addr %s159, 8
          %s161 = scalar_lea.vmem %s0, %s160
          %s162 = smul.u32 4, %s19
        $region20: #{tpu_custom_call.1} parent=15 // pred_fallthru
          _
        // Predicated region
        $region21: #{tpu_custom_call.1} parent=15 // pred_check
          %p163 = pneg %p72
        $region22: #{tpu_custom_call.1} parent=15 // pred_check_branch
          %165 = sbr.rel (%p163) target = $region24
        $region23: #{tpu_custom_call.1} parent=15 // pred_region
          %s166 = smul.u32 4, %s19
          %p167 = scmp.lt.s32.totalorder %s166, 7
          %s168 = scalar_select %p167, %s166, 7
          %s169 = smul.addr %s168, 8
          %s170 = scalar_lea.vmem %s1, %s169
          %s171 = smul.u32 4, %s19
        $region24: #{tpu_custom_call.1} parent=15 // pred_fallthru
          _
        // Predicated region
        $region25: #{tpu_custom_call.1} parent=15 // pred_check
          %p172 = pneg %p98
        $region26: #{tpu_custom_call.1} parent=15 // pred_check_branch
          %174 = sbr.rel (%p172) target = $region28
        $region27: #{tpu_custom_call.1} parent=15 // pred_region
          %s175 = smul.u32 4, %s19
          %p176 = scmp.lt.s32.totalorder %s175, 7
          %s177 = scalar_select %p176, %s175, 7
          %s178 = smul.addr %s177, 8
          %s179 = scalar_lea.vmem %s2, %s178
          %s180 = smul.u32 4, %s19
        $region28: #{tpu_custom_call.1} parent=15 // pred_fallthru
          _
      $region16: #{tpu_custom_call.1} parent=5 // pred_fallthru
        _
      %p181 = scmp.le.s32.totalorder 1, %s12
      %p182 = scmp.lt.s32.totalorder %s12, 3
      %p183 = pnand %p181, %p182
      %p184 = pneg %p183
      // Predicated region
      $region29: #{tpu_custom_call.1} parent=5 // pred_check
        _
      $region30: #{tpu_custom_call.1} parent=5 // pred_check_branch
        %186 = sbr.rel (%p183) target = $region32
      $region31: #{tpu_custom_call.1} parent=5 // pred_region
        %s187 = ssub.s32 %s12, 1
        %s188 = smul.u32 4, %s21
        %p189 = scmp.lt.s32.totalorder %s188, 7
        %s190 = scalar_select %p189, %s188, 7
        %p191 = scmp.lt.s32.totalorder %s22, 0
        %s192 = scalar_select %p191, %s22, 0
        %s193 = sadd.s32 %s192, %s190
        %s194 = smul.addr %s193, 8
        %s195 = scalar_lea.vmem %s0, %s194
        %p196 = pneg %p52
        %p197 = pneg %p49
        %s198 = smul.u32 4, %s21
        %p199 = scmp.lt.s32.totalorder %s198, 7
        %s200 = scalar_select %p199, %s198, 7
        %s201 = smul.addr %s200, 8
        %s202 = scalar_lea.vmem %s1, %s201
        %p203 = pneg %p78
        %p204 = pneg %p75
        %s205 = smul.u32 4, %s21
        %p206 = scmp.lt.s32.totalorder %s205, 7
        %s207 = scalar_select %p206, %s205, 7
        %s208 = smul.addr %s207, 8
        %s209 = scalar_lea.vmem %s2, %s208
        %p210 = pneg %p104
        %p211 = pneg %p101
        %p212 = pneg %p132
        %p213 = pneg %p129
        %s214 = sand.u32 %s119, 1
        %s215 = scalar_lea.sflag [#allocation3], %s214
        %s216 = sand.u32 %s119, 1
        %s217 = smul.addr %s216, 32
        %s218 = scalar_lea.vmem [#allocation2], %s217
        %s219 = smul.u32 4, %s21
        %p220 = scmp.lt.s32.totalorder %s219, 7
        %s221 = scalar_select %p220, %s219, 7
        %p222 = scmp.lt.s32.totalorder %s22, 0
        %s223 = scalar_select %p222, %s22, 0
        %s224 = sadd.s32 %s223, %s221
        %s225 = smul.addr %s224, 8
        %s226 = scalar_lea.vmem %s0, %s225
        %s227 = smul.u32 4, %s21
        %s228 = smul.u32 4, %s21
        %p229 = scmp.lt.s32.totalorder %s228, 7
        %s230 = scalar_select %p229, %s228, 7
        %s231 = smul.addr %s230, 8
        %s232 = scalar_lea.vmem %s1, %s231
        %s233 = smul.u32 4, %s21
        %s234 = smul.u32 4, %s21
        %p235 = scmp.lt.s32.totalorder %s234, 7
        %s236 = scalar_select %p235, %s234, 7
        %s237 = smul.addr %s236, 8
        %s238 = scalar_lea.vmem %s2, %s237
        %s239 = smul.u32 4, %s21
        %s240 = smul.u32 4, %s21
        %v241 = vld [vmem:[%s226] sm:$0xff]
        %v242 = vld [vmem:[%s226 + $0x8] sm:$0xff]
        %v243 = vld [vmem:[%s226 + $0x10] sm:$0xff]
        %v244 = vld [vmem:[%s226 + $0x18] sm:$0xff]
        %v245 = vld [vmem:[%s232] sm:$0xff]
        %v246 = vld [vmem:[%s232 + $0x8] sm:$0xff]
        %v247 = vld [vmem:[%s232 + $0x10] sm:$0xff]
        %v248 = vld [vmem:[%s232 + $0x18] sm:$0xff]
        %250 = vset.pattern.permute.xlu0 0
        %251 = vperm.xlu0 %250, %v245
        %v252 = vpop.permute.xlu0 %251
        %255 = vset.pattern.permute.xlu0 0
        %256 = vperm.xlu0 %255, %v246
        %v257 = vpop.permute.xlu0 %256
        %260 = vset.pattern.permute.xlu0 0
        %261 = vperm.xlu0 %260, %v247
        %v262 = vpop.permute.xlu0 %261
        %265 = vset.pattern.permute.xlu0 0
        %266 = vperm.xlu0 %265, %v248
        %v267 = vpop.permute.xlu0 %266
        %v269 = vmul.f32 %v252, %v241
        %v270 = vmul.f32 %v257, %v242
        %v271 = vmul.f32 %v262, %v243
        %v272 = vmul.f32 %v267, %v244
        %v273 = vand.u32 2147483647, %v269
        %vm274 = vcmp.le.f32.partialorder %v273, 0.7853982
        %vm275 = vcmp.lt.s32.totalorder %v269, 0
        %v276 = vand.u32 %v269, 2139095040
        %v277 = vshrl.u32 %v276, 23
        %v278 = vsub.s32 %v277, 127
        %v279 = vand.u32 2147483647, %v269
        %v280 = vand.u32 %v279, 8388607
        %v281 = vor.u32 %v280, 8388608
        %v282 = vsub.s32 0, %v281
        %v283 = vadd.s32 %v278, 1
        %vm284 = vcmp.gt.s32.totalorder %v283, 0
        %v285 = vsel %vm284, %v283, 0
        %v286 = vshrl.u32 %v285, 5
        %v287 = vand.u32 %v285, 31
        %v288 = vsub.s32 32, %v287
        %v289 = vshrl.u32 683565275, %v288
        %v290 = vshll.u32 683565275, %v287
        %v291 = vshrl.u32 2475754826, %v288
        %v292 = vor.u32 %v290, %v291
        %v293 = vshll.u32 2475754826, %v287
        %v294 = vshrl.u32 2131351028, %v288
        %v295 = vor.u32 %v293, %v294
        %v296 = vshll.u32 2131351028, %v287
        %v297 = vshrl.u32 2102212464, %v288
        %v298 = vor.u32 %v296, %v297
        %v299 = vshll.u32 2102212464, %v287
        %v300 = vshrl.u32 920167782, %v288
        %v301 = vor.u32 %v299, %v300
        %v302 = vshll.u32 920167782, %v287
        %v303 = vshrl.u32 1326507024, %v288
        %v304 = vor.u32 %v302, %v303
        %vm305 = vcmp.lt.s32.totalorder %v286, 1
        %vm306 = vcmp.lt.s32.totalorder %v286, 2
        %vm307 = vcmp.lt.s32.totalorder %v286, 3
        %vm308 = vcmp.lt.s32.totalorder %v286, 4
        %v309 = vsel %vm305, %v289, %v292
        %v310 = vsel %vm308, %v298, 2102212464
        %v311 = vsel %vm307, %v295, %v310
        %v312 = vsel %vm306, %v309, %v311
        %v313 = vsel %vm305, %v292, %v295
        %v314 = vsel %vm308, %v301, 920167782
        %v315 = vsel %vm307, %v298, %v314
        %v316 = vsel %vm306, %v313, %v315
        %v317 = vsel %vm305, %v295, %v298
        %v318 = vsel %vm308, %v304, 1326507024
        %v319 = vsel %vm307, %v301, %v318
        %v320 = vsel %vm306, %v317, %v319
        %v321 = vshll.u32 %v281, 8
        %v322 = vmul.u32.u64.compose %v321, %v320
        %v323 = vextract.low.u32 %v322
        %v324 = vextract.high.u32 %v322
        %v325 = vmul.u32.u64.compose %v321, %v316
        %v326 = vextract.low.u32 %v325
        %v327 = vextract.high.u32 %v325
        %v328 = vmul.u32 %v321, %v312
        %v329 = vadd.s32 %v324, %v326
        %vm330 = vc.u32 %v324, %v326
        %v331 = vadd.s32 %v327, 1
        %v332 = vsel %vm330, %v331, %v327
        %v333 = vadd.s32 %v328, %v332
        %v334 = vadd.s32 %v333, 536870912
        %v335 = vshrl.u32 %v334, 30
        %v336 = vshll.u32 %v335, 30
        %v337 = vsub.s32 %v333, %v336
        %vm338 = vcmp.lt.s32.totalorder %v337, 0
        %v339 = vsub.s32 0, %v337
        %v340 = vsel %vm338, %v339, %v337
        %v341 = vclz %v340
        %v342 = vsub.s32 %v341, 2
        %vm343 = vcmp.gt.s32.totalorder 0, %v342
        %v344 = vsel %vm343, 0, %v342
        %v345 = vsub.s32 32, %v344
        %v346 = vshll.u32 %v337, %v344
        %v347 = vshrl.u32 %v329, %v345
        %v348 = vor.u32 %v346, %v347
        %v349 = vsub.s32 4294967266, %v344
        %v350 = vadd.s32 %v349, 127
        %v351 = vshll.u32 %v350, 23
        %v352 = vor.u32 4788187, %v351
        %v353 = vand.u32 2147483647, %v352
        %v355 = vcvt.s32.f32 %v348
        %v356 = vmul.f32 %v355, %v353
        %v357 = vxor.u32 %v356, 2147483648
        %v358 = vsel %vm275, %v357, %v356
        %v359 = vsub.s32 4, %v335
        %v360 = vsel %vm275, %v359, %v335
        %v361 = vsel %vm274, %v269, %v358
        %v362 = vsel %vm274, 0, %v360
        %v363 = vcosq.f32.pop %v361
        %v364 = vsinq.f32.pop %v361
        %vm365 = vweird.f32 %v269
        %v366 = vand.u32 %v362, 3
        %vm367 = vcmp.lt.s32.totalorder %v366, 2
        %vm368 = vcmp.eq.s32.totalorder %v366, 0
        %v369 = vxor.u32 %v364, 2147483648
        %v370 = vsel %vm368, %v363, %v369
        %vm371 = vcmp.eq.s32.totalorder %v366, 2
        %v372 = vxor.u32 %v363, 2147483648
        %v373 = vsel %vm371, %v372, %v364
        %v374 = vsel %vm367, %v370, %v373
        %v375 = vsel %vm365, nan, %v374
        %v376 = vand.u32 2147483647, %v270
        %vm377 = vcmp.le.f32.partialorder %v376, 0.7853982
        %vm378 = vcmp.lt.s32.totalorder %v270, 0
        %v379 = vand.u32 %v270, 2139095040
        %v380 = vshrl.u32 %v379, 23
        %v381 = vsub.s32 %v380, 127
        %v382 = vand.u32 2147483647, %v270
        %v383 = vand.u32 %v382, 8388607
        %v384 = vor.u32 %v383, 8388608
        %v385 = vsub.s32 0, %v384
        %v386 = vadd.s32 %v381, 1
        %vm387 = vcmp.gt.s32.totalorder %v386, 0
        %v388 = vsel %vm387, %v386, 0
        %v389 = vshrl.u32 %v388, 5
        %v390 = vand.u32 %v388, 31
        %v391 = vsub.s32 32, %v390
        %v392 = vshrl.u32 683565275, %v391
        %v393 = vshll.u32 683565275, %v390
        %v394 = vshrl.u32 2475754826, %v391
        %v395 = vor.u32 %v393, %v394
        %v396 = vshll.u32 2475754826, %v390
        %v397 = vshrl.u32 2131351028, %v391
        %v398 = vor.u32 %v396, %v397
        %v399 = vshll.u32 2131351028, %v390
        %v400 = vshrl.u32 2102212464, %v391
        %v401 = vor.u32 %v399, %v400
        %v402 = vshll.u32 2102212464, %v390
        %v403 = vshrl.u32 920167782, %v391
        %v404 = vor.u32 %v402, %v403
        %v405 = vshll.u32 920167782, %v390
        %v406 = vshrl.u32 1326507024, %v391
        %v407 = vor.u32 %v405, %v406
        %vm408 = vcmp.lt.s32.totalorder %v389, 1
        %vm409 = vcmp.lt.s32.totalorder %v389, 2
        %vm410 = vcmp.lt.s32.totalorder %v389, 3
        %vm411 = vcmp.lt.s32.totalorder %v389, 4
        %v412 = vsel %vm408, %v392, %v395
        %v413 = vsel %vm411, %v401, 2102212464
        %v414 = vsel %vm410, %v398, %v413
        %v415 = vsel %vm409, %v412, %v414
        %v416 = vsel %vm408, %v395, %v398
        %v417 = vsel %vm411, %v404, 920167782
        %v418 = vsel %vm410, %v401, %v417
        %v419 = vsel %vm409, %v416, %v418
        %v420 = vsel %vm408, %v398, %v401
        %v421 = vsel %vm411, %v407, 1326507024
        %v422 = vsel %vm410, %v404, %v421
        %v423 = vsel %vm409, %v420, %v422
        %v424 = vshll.u32 %v384, 8
        %v425 = vmul.u32.u64.compose %v424, %v423
        %v426 = vextract.low.u32 %v425
        %v427 = vextract.high.u32 %v425
        %v428 = vmul.u32.u64.compose %v424, %v419
        %v429 = vextract.low.u32 %v428
        %v430 = vextract.high.u32 %v428
        %v431 = vmul.u32 %v424, %v415
        %v432 = vadd.s32 %v427, %v429
        %vm433 = vc.u32 %v427, %v429
        %v434 = vadd.s32 %v430, 1
        %v435 = vsel %vm433, %v434, %v430
        %v436 = vadd.s32 %v431, %v435
        %v437 = vadd.s32 %v436, 536870912
        %v438 = vshrl.u32 %v437, 30
        %v439 = vshll.u32 %v438, 30
        %v440 = vsub.s32 %v436, %v439
        %vm441 = vcmp.lt.s32.totalorder %v440, 0
        %v442 = vsub.s32 0, %v440
        %v443 = vsel %vm441, %v442, %v440
        %v444 = vclz %v443
        %v445 = vsub.s32 %v444, 2
        %vm446 = vcmp.gt.s32.totalorder 0, %v445
        %v447 = vsel %vm446, 0, %v445
        %v448 = vsub.s32 32, %v447
        %v449 = vshll.u32 %v440, %v447
        %v450 = vshrl.u32 %v432, %v448
        %v451 = vor.u32 %v449, %v450
        %v452 = vsub.s32 4294967266, %v447
        %v453 = vadd.s32 %v452, 127
        %v454 = vshll.u32 %v453, 23
        %v455 = vor.u32 4788187, %v454
        %v456 = vand.u32 2147483647, %v455
        %v458 = vcvt.s32.f32 %v451
        %v459 = vmul.f32 %v458, %v456
        %v460 = vxor.u32 %v459, 2147483648
        %v461 = vsel %vm378, %v460, %v459
        %v462 = vsub.s32 4, %v438
        %v463 = vsel %vm378, %v462, %v438
        %v464 = vsel %vm377, %v270, %v461
        %v465 = vsel %vm377, 0, %v463
        %v466 = vcosq.f32.pop %v464
        %v467 = vsinq.f32.pop %v464
        %vm468 = vweird.f32 %v270
        %v469 = vand.u32 %v465, 3
        %vm470 = vcmp.lt.s32.totalorder %v469, 2
        %vm471 = vcmp.eq.s32.totalorder %v469, 0
        %v472 = vxor.u32 %v467, 2147483648
        %v473 = vsel %vm471, %v466, %v472
        %vm474 = vcmp.eq.s32.totalorder %v469, 2
        %v475 = vxor.u32 %v466, 2147483648
        %v476 = vsel %vm474, %v475, %v467
        %v477 = vsel %vm470, %v473, %v476
        %v478 = vsel %vm468, nan, %v477
        %v479 = vand.u32 2147483647, %v271
        %vm480 = vcmp.le.f32.partialorder %v479, 0.7853982
        %vm481 = vcmp.lt.s32.totalorder %v271, 0
        %v482 = vand.u32 %v271, 2139095040
        %v483 = vshrl.u32 %v482, 23
        %v484 = vsub.s32 %v483, 127
        %v485 = vand.u32 2147483647, %v271
        %v486 = vand.u32 %v485, 8388607
        %v487 = vor.u32 %v486, 8388608
        %v488 = vsub.s32 0, %v487
        %v489 = vadd.s32 %v484, 1
        %vm490 = vcmp.gt.s32.totalorder %v489, 0
        %v491 = vsel %vm490, %v489, 0
        %v492 = vshrl.u32 %v491, 5
        %v493 = vand.u32 %v491, 31
        %v494 = vsub.s32 32, %v493
        %v495 = vshrl.u32 683565275, %v494
        %v496 = vshll.u32 683565275, %v493
        %v497 = vshrl.u32 2475754826, %v494
        %v498 = vor.u32 %v496, %v497
        %v499 = vshll.u32 2475754826, %v493
        %v500 = vshrl.u32 2131351028, %v494
        %v501 = vor.u32 %v499, %v500
        %v502 = vshll.u32 2131351028, %v493
        %v503 = vshrl.u32 2102212464, %v494
        %v504 = vor.u32 %v502, %v503
        %v505 = vshll.u32 2102212464, %v493
        %v506 = vshrl.u32 920167782, %v494
        %v507 = vor.u32 %v505, %v506
        %v508 = vshll.u32 920167782, %v493
        %v509 = vshrl.u32 1326507024, %v494
        %v510 = vor.u32 %v508, %v509
        %vm511 = vcmp.lt.s32.totalorder %v492, 1
        %vm512 = vcmp.lt.s32.totalorder %v492, 2
        %vm513 = vcmp.lt.s32.totalorder %v492, 3
        %vm514 = vcmp.lt.s32.totalorder %v492, 4
        %v515 = vsel %vm511, %v495, %v498
        %v516 = vsel %vm514, %v504, 2102212464
        %v517 = vsel %vm513, %v501, %v516
        %v518 = vsel %vm512, %v515, %v517
        %v519 = vsel %vm511, %v498, %v501
        %v520 = vsel %vm514, %v507, 920167782
        %v521 = vsel %vm513, %v504, %v520
        %v522 = vsel %vm512, %v519, %v521
        %v523 = vsel %vm511, %v501, %v504
        %v524 = vsel %vm514, %v510, 1326507024
        %v525 = vsel %vm513, %v507, %v524
        %v526 = vsel %vm512, %v523, %v525
        %v527 = vshll.u32 %v487, 8
        %v528 = vmul.u32.u64.compose %v527, %v526
        %v529 = vextract.low.u32 %v528
        %v530 = vextract.high.u32 %v528
        %v531 = vmul.u32.u64.compose %v527, %v522
        %v532 = vextract.low.u32 %v531
        %v533 = vextract.high.u32 %v531
        %v534 = vmul.u32 %v527, %v518
        %v535 = vadd.s32 %v530, %v532
        %vm536 = vc.u32 %v530, %v532
        %v537 = vadd.s32 %v533, 1
        %v538 = vsel %vm536, %v537, %v533
        %v539 = vadd.s32 %v534, %v538
        %v540 = vadd.s32 %v539, 536870912
        %v541 = vshrl.u32 %v540, 30
        %v542 = vshll.u32 %v541, 30
        %v543 = vsub.s32 %v539, %v542
        %vm544 = vcmp.lt.s32.totalorder %v543, 0
        %v545 = vsub.s32 0, %v543
        %v546 = vsel %vm544, %v545, %v543
        %v547 = vclz %v546
        %v548 = vsub.s32 %v547, 2
        %vm549 = vcmp.gt.s32.totalorder 0, %v548
        %v550 = vsel %vm549, 0, %v548
        %v551 = vsub.s32 32, %v550
        %v552 = vshll.u32 %v543, %v550
        %v553 = vshrl.u32 %v535, %v551
        %v554 = vor.u32 %v552, %v553
        %v555 = vsub.s32 4294967266, %v550
        %v556 = vadd.s32 %v555, 127
        %v557 = vshll.u32 %v556, 23
        %v558 = vor.u32 4788187, %v557
        %v559 = vand.u32 2147483647, %v558
        %v561 = vcvt.s32.f32 %v554
        %v562 = vmul.f32 %v561, %v559
        %v563 = vxor.u32 %v562, 2147483648
        %v564 = vsel %vm481, %v563, %v562
        %v565 = vsub.s32 4, %v541
        %v566 = vsel %vm481, %v565, %v541
        %v567 = vsel %vm480, %v271, %v564
        %v568 = vsel %vm480, 0, %v566
        %v569 = vcosq.f32.pop %v567
        %v570 = vsinq.f32.pop %v567
        %vm571 = vweird.f32 %v271
        %v572 = vand.u32 %v568, 3
        %vm573 = vcmp.lt.s32.totalorder %v572, 2
        %vm574 = vcmp.eq.s32.totalorder %v572, 0
        %v575 = vxor.u32 %v570, 2147483648
        %v576 = vsel %vm574, %v569, %v575
        %vm577 = vcmp.eq.s32.totalorder %v572, 2
        %v578 = vxor.u32 %v569, 2147483648
        %v579 = vsel %vm577, %v578, %v570
        %v580 = vsel %vm573, %v576, %v579
        %v581 = vsel %vm571, nan, %v580
        %v582 = vand.u32 2147483647, %v272
        %vm583 = vcmp.le.f32.partialorder %v582, 0.7853982
        %vm584 = vcmp.lt.s32.totalorder %v272, 0
        %v585 = vand.u32 %v272, 2139095040
        %v586 = vshrl.u32 %v585, 23
        %v587 = vsub.s32 %v586, 127
        %v588 = vand.u32 2147483647, %v272
        %v589 = vand.u32 %v588, 8388607
        %v590 = vor.u32 %v589, 8388608
        %v591 = vsub.s32 0, %v590
        %v592 = vadd.s32 %v587, 1
        %vm593 = vcmp.gt.s32.totalorder %v592, 0
        %v594 = vsel %vm593, %v592, 0
        %v595 = vshrl.u32 %v594, 5
        %v596 = vand.u32 %v594, 31
        %v597 = vsub.s32 32, %v596
        %v598 = vshrl.u32 683565275, %v597
        %v599 = vshll.u32 683565275, %v596
        %v600 = vshrl.u32 2475754826, %v597
        %v601 = vor.u32 %v599, %v600
        %v602 = vshll.u32 2475754826, %v596
        %v603 = vshrl.u32 2131351028, %v597
        %v604 = vor.u32 %v602, %v603
        %v605 = vshll.u32 2131351028, %v596
        %v606 = vshrl.u32 2102212464, %v597
        %v607 = vor.u32 %v605, %v606
        %v608 = vshll.u32 2102212464, %v596
        %v609 = vshrl.u32 920167782, %v597
        %v610 = vor.u32 %v608, %v609
        %v611 = vshll.u32 920167782, %v596
        %v612 = vshrl.u32 1326507024, %v597
        %v613 = vor.u32 %v611, %v612
        %vm614 = vcmp.lt.s32.totalorder %v595, 1
        %vm615 = vcmp.lt.s32.totalorder %v595, 2
        %vm616 = vcmp.lt.s32.totalorder %v595, 3
        %vm617 = vcmp.lt.s32.totalorder %v595, 4
        %v618 = vsel %vm614, %v598, %v601
        %v619 = vsel %vm617, %v607, 2102212464
        %v620 = vsel %vm616, %v604, %v619
        %v621 = vsel %vm615, %v618, %v620
        %v622 = vsel %vm614, %v601, %v604
        %v623 = vsel %vm617, %v610, 920167782
        %v624 = vsel %vm616, %v607, %v623
        %v625 = vsel %vm615, %v622, %v624
        %v626 = vsel %vm614, %v604, %v607
        %v627 = vsel %vm617, %v613, 1326507024
        %v628 = vsel %vm616, %v610, %v627
        %v629 = vsel %vm615, %v626, %v628
        %v630 = vshll.u32 %v590, 8
        %v631 = vmul.u32.u64.compose %v630, %v629
        %v632 = vextract.low.u32 %v631
        %v633 = vextract.high.u32 %v631
        %v634 = vmul.u32.u64.compose %v630, %v625
        %v635 = vextract.low.u32 %v634
        %v636 = vextract.high.u32 %v634
        %v637 = vmul.u32 %v630, %v621
        %v638 = vadd.s32 %v633, %v635
        %vm639 = vc.u32 %v633, %v635
        %v640 = vadd.s32 %v636, 1
        %v641 = vsel %vm639, %v640, %v636
        %v642 = vadd.s32 %v637, %v641
        %v643 = vadd.s32 %v642, 536870912
        %v644 = vshrl.u32 %v643, 30
        %v645 = vshll.u32 %v644, 30
        %v646 = vsub.s32 %v642, %v645
        %vm647 = vcmp.lt.s32.totalorder %v646, 0
        %v648 = vsub.s32 0, %v646
        %v649 = vsel %vm647, %v648, %v646
        %v650 = vclz %v649
        %v651 = vsub.s32 %v650, 2
        %vm652 = vcmp.gt.s32.totalorder 0, %v651
        %v653 = vsel %vm652, 0, %v651
        %v654 = vsub.s32 32, %v653
        %v655 = vshll.u32 %v646, %v653
        %v656 = vshrl.u32 %v638, %v654
        %v657 = vor.u32 %v655, %v656
        %v658 = vsub.s32 4294967266, %v653
        %v659 = vadd.s32 %v658, 127
        %v660 = vshll.u32 %v659, 23
        %v661 = vor.u32 4788187, %v660
        %v662 = vand.u32 2147483647, %v661
        %v664 = vcvt.s32.f32 %v657
        %v665 = vmul.f32 %v664, %v662
        %v666 = vxor.u32 %v665, 2147483648
        %v667 = vsel %vm584, %v666, %v665
        %v668 = vsub.s32 4, %v644
        %v669 = vsel %vm584, %v668, %v644
        %v670 = vsel %vm583, %v272, %v667
        %v671 = vsel %vm583, 0, %v669
        %v672 = vcosq.f32.pop %v670
        %v673 = vsinq.f32.pop %v670
        %vm674 = vweird.f32 %v272
        %v675 = vand.u32 %v671, 3
        %vm676 = vcmp.lt.s32.totalorder %v675, 2
        %vm677 = vcmp.eq.s32.totalorder %v675, 0
        %v678 = vxor.u32 %v673, 2147483648
        %v679 = vsel %vm677, %v672, %v678
        %vm680 = vcmp.eq.s32.totalorder %v675, 2
        %v681 = vxor.u32 %v672, 2147483648
        %v682 = vsel %vm680, %v681, %v673
        %v683 = vsel %vm676, %v679, %v682
        %v684 = vsel %vm674, nan, %v683
        %v685 = vsub.f32 1.0, %v375
        %v686 = vsub.f32 1.0, %v478
        %v687 = vsub.f32 1.0, %v581
        %v688 = vsub.f32 1.0, %v684
        %v689 = vld [vmem:[%s238] sm:$0xff]
        %v690 = vld [vmem:[%s238 + $0x8] sm:$0xff]
        %v691 = vld [vmem:[%s238 + $0x10] sm:$0xff]
        %v692 = vld [vmem:[%s238 + $0x18] sm:$0xff]
        %694 = vset.pattern.permute.xlu0 0
        %695 = vperm.xlu0 %694, %v689
        %v696 = vpop.permute.xlu0 %695
        %699 = vset.pattern.permute.xlu0 0
        %700 = vperm.xlu0 %699, %v690
        %v701 = vpop.permute.xlu0 %700
        %704 = vset.pattern.permute.xlu0 0
        %705 = vperm.xlu0 %704, %v691
        %v706 = vpop.permute.xlu0 %705
        %709 = vset.pattern.permute.xlu0 0
        %710 = vperm.xlu0 %709, %v692
        %v711 = vpop.permute.xlu0 %710
        %v713 = vmul.f32 %v685, %v696
        %v714 = vmul.f32 %v686, %v701
        %v715 = vmul.f32 %v687, %v706
        %v716 = vmul.f32 %v688, %v711
        %v717 = vadd.f32 %v241, %v713
        %v718 = vadd.f32 %v242, %v714
        %v719 = vadd.f32 %v243, %v715
        %v720 = vadd.f32 %v244, %v716
        %vm721 = vcmask 523264
        %722 = vst.msk [vmem:[%s218] sm:$0xff] %vm721, %v717
        %723 = vst.msk [vmem:[%s218 + $0x8] sm:$0xff] %vm721, %v718
        %724 = vst.msk [vmem:[%s218 + $0x10] sm:$0xff] %vm721, %v719
        %725 = vst.msk [vmem:[%s218 + $0x18] sm:$0xff] %vm721, %v720
        %s726 = sand.u32 %s119, 1
        %s727 = scalar_lea.sflag [#allocation3], %s726
        %s728 = sand.u32 %s119, 1
        %s729 = smul.addr %s728, 32
        %s730 = scalar_lea.vmem [#allocation2], %s729
        // Predicated region
        $region33: #{tpu_custom_call.1} parent=31 // pred_check
          %p731 = pneg %p129
        $region34: #{tpu_custom_call.1} parent=31 // pred_check_branch
          %733 = sbr.rel (%p731) target = $region36
        $region35: #{tpu_custom_call.1} parent=31 // pred_region
          %s734 = smul.u32 4, %s21
          %s736 = ssub.s32 512, 512
          %737 = vsyncadd %s727, %s736
          %s738 = sadd.s32 %s22, %s734
          %s739 = smul.addr %s738, 128
          %s740 = scalar_lea.hbm %s3, %s739
          %s741 = sshll.u32 %s730, 4
          %s742 = int_to_ptr.vmem [resolvable:$true] %s741
          %747 = dma.vmem_to_hbm [thread:$0]  %s742, 512, %s740, %s727, 128, 128, 8
        $region36: #{tpu_custom_call.1} parent=31 // pred_fallthru
          _
      $region32: #{tpu_custom_call.1} parent=5 // pred_fallthru
        _
      %p748 = scmp.le.s32.totalorder 2, %s12
      // Predicated region
      $region37: #{tpu_custom_call.1} parent=5 // pred_check
        %p749 = pneg %p748
      $region38: #{tpu_custom_call.1} parent=5 // pred_check_branch
        %751 = sbr.rel (%p749) target = $region40
      $region39: #{tpu_custom_call.1} parent=5 // pred_region
        %s752 = ssub.s32 %s12, 2
        // Predicated region
        $region41: #{tpu_custom_call.1} parent=39 // pred_check
          %p753 = pneg %p135
        $region42: #{tpu_custom_call.1} parent=39 // pred_check_branch
          %755 = sbr.rel (%p753) target = $region44
        $region43: #{tpu_custom_call.1} parent=39 // pred_region
          %s756 = sand.u32 %s120, 1
          %s757 = scalar_lea.sflag [#allocation3], %s756
          %s758 = sand.u32 %s120, 1
          %s759 = smul.addr %s758, 32
          %s760 = scalar_lea.vmem [#allocation2], %s759
          %761 = dma.done %s757, 512
        $region44: #{tpu_custom_call.1} parent=39 // pred_fallthru
          _
      $region40: #{tpu_custom_call.1} parent=5 // pred_fallthru
        _
    $region6: #{tpu_custom_call.1} parent=1 // loop_footer
      %s16 = sadd.s32 1, %s12
    $region7: #{tpu_custom_call.1} parent=1 // loop_footer_branch
      %11 = sbr.rel target = $region3
    $region8: #{tpu_custom_call.1} parent=1 // loop_exit
      _
    %762 = vsyncpa [#allocation3], 1
    %s763 = scalar_lea.sflag [#allocation3], 1
    %764 = vsyncpa %s763, 1

</llo_original>
